<compile_context>
chip_gen: v5e
topology: v5e:2x2
jax: 0.10.0
libtpu: 0.0.40
codegen_flags: <defaults>
</compile_context>

<pallas_src>
import functools
import math

import jax
import jax.numpy as jnp
import numpy as np
from jax.experimental import pallas as pl
from jax.experimental.pallas import tpu as pltpu

_LANES = 128
_ROW_ALIGN = 32                           # sublane multiple safe for f32/bf16/i8/fp8
_TARGET_BLOCK_BYTES = 2 * 1024 * 1024     # ~2 MiB per input per grid step
_MAX_TILE_ROWS = 8192


def _round_up(x, m):
    return ((x + m - 1) // m) * m


def _pick_chunk(tile):
    for c in (512, 256, 128, 64, 32, 16, 8):
        if tile % c == 0:
            return c
    return tile


def _default_n_shards():
    # Two TensorCores per chip only on v7x; the shard axis is pure overhead
    # (extra padding + duplicate final work) on single-core v5e/v6e.
    try:
        kind = jax.devices()[0].device_kind.lower()
    except Exception:
        return 1
    return 2 if ("v7" in kind or "7x" in kind) else 1


def _alpha_reg_mse_kernel(yp_ref, yt_ref, *rest, rows_in, n_elems, alpha_weight,
                          has_alpha, steps, tile, chunk):
    """Grid = (shards, steps). Axis 0 parallel (megacore), axis 1 reduction.

    acc_ref: VMEM (8, 128) f32 running per-lane sum of squared diffs.
    out_ref: VMEM (1, 128) f32 per-shard partial, written on the last step.
    """
    if has_alpha:
        alpha_ref, out_ref, acc_ref = rest
    else:
        out_ref, acc_ref = rest

    # All program_id / num_programs reads at kernel top level (never inside a
    # pl.when body) — only the derived scalars are used inside the branches.
    shard = pl.program_id(0)
    step = pl.program_id(1)
    last_step = pl.num_programs(1) - 1

    @pl.when(step == 0)
    def _():
        acc_ref[...] = jnp.zeros_like(acc_ref)

    # Unclamped logical row offset of this block.  The DMA index_map is clamped
    # to the last real block, so masking with the *logical* row index makes both
    # partial-block garbage and clamped duplicate reads contribute exactly zero.
    row0 = (shard * steps + step) * tile
    base_rows = jax.lax.broadcasted_iota(jnp.int32, (chunk, _LANES), 0)

    n_chunks = tile // chunk
    for c in range(n_chunks):       # static unroll; temporaries stay chunk-sized
        r0 = c * chunk
        # Cast-on-load: stream native dtype from HBM, widen in-register.
        yp = yp_ref[r0:r0 + chunk, :].astype(jnp.float32)
        yt = yt_ref[r0:r0 + chunk, :].astype(jnp.float32)
        d = yp - yt
        rows = base_rows + (row0 + r0)
        d = jnp.where(rows < rows_in, d, 0.0)       # select, so NaN garbage is safe
        sq = d * d
        if chunk % 8 == 0:
            # Fold (chunk,128) -> (8,128) with pure VPU vreg adds.
            acc_ref[...] += jnp.sum(sq.reshape(-1, 8, _LANES), axis=0)
        else:
            # Tiny full-dim blocks with odd row counts: one sublane reduce.
            acc_ref[0:1, :] = acc_ref[0:1, :] + jnp.sum(sq, axis=0, keepdims=True)

    @pl.when(step == last_step)
    def _():
        # One sublane reduce per shard; the lane sum happens in the wrapper.
        partial = jnp.sum(acc_ref[...], axis=0, keepdims=True) / jnp.float32(n_elems)
        out_ref[...] = partial
        if has_alpha:
            @pl.when(shard == 0)        # only shard 0 pays for the sigmoid sum
            def _():
                reg = jnp.sum(jax.nn.sigmoid(alpha_ref[...]))
                lane = jax.lax.broadcasted_iota(jnp.int32, (1, _LANES), 1)
                out_ref[...] = out_ref[...] + jnp.where(
                    lane == 0, jnp.float32(alpha_weight) * reg, 0.0)


def alpha_regularized_mse_loss(y_pred, y_true, alpha, alpha_weight,
                               *, tile_rows=None, n_shards=None):
    """Pallas equivalent of AlphaRegularizationWrapper(nn.MSELoss(), w)(...)."""
    assert y_pred.shape == y_true.shape
    total = int(math.prod(y_pred.shape))
    assert total > 0

    rows_in = pl.cdiv(total, _LANES)          # logical lane-dense rows

    if n_shards is None:
        n_shards = _default_n_shards()
    if rows_in < 4 * _ROW_ALIGN:              # too small to split across cores
        n_shards = 1

    if tile_rows is None:
        itemsize = jnp.dtype(y_pred.dtype).itemsize
        tile_rows = _TARGET_BLOCK_BYTES // (_LANES * itemsize)
    tile_target = int(min(max(int(tile_rows), _ROW_ALIGN), _MAX_TILE_ROWS))

    if n_shards == 1 and rows_in <= tile_target:
        # Single full-extent block (always a legal block shape).
        tile, steps = rows_in, 1
    else:
        # Pick steps first, then rebalance the tile -> padding waste < 32 rows/shard.
        per_shard = pl.cdiv(rows_in, n_shards)
        steps = max(1, pl.cdiv(per_shard, tile_target))
        tile = _round_up(pl.cdiv(per_shard, steps), _ROW_ALIGN)
        steps = max(1, pl.cdiv(per_shard, tile))
    total_blocks = pl.cdiv(rows_in, tile)
    chunk = _pick_chunk(tile)

    # Lane-dense (rows, 128) views; NO host-side copy unless numel % 128 != 0.
    yp = jnp.reshape(y_pred, (-1,))
    yt = jnp.reshape(y_true, (-1,))
    lane_pad = rows_in * _LANES - total
    if lane_pad:
        # TODO(synk): rare ragged-lane case still materializes one padded copy;
        # zeros contribute (0-0)^2 == 0 and the mean divides by the true count.
        yp = jnp.pad(yp, (0, lane_pad))
        yt = jnp.pad(yt, (0, lane_pad))
    yp = jnp.reshape(yp, (rows_in, _LANES))
    yt = jnp.reshape(yt, (rows_in, _LANES))

    def row_block(s, k):
        # Clamp block indices past the last real block; their contribution is
        # fully masked inside the kernel, so the duplicate read is harmless.
        return (jnp.minimum(s * steps + k, total_blocks - 1), 0)

    inputs = [yp, yt]
    in_specs = [pl.BlockSpec((tile, _LANES), row_block),
                pl.BlockSpec((tile, _LANES), row_block)]

    has_alpha = alpha is not None and int(math.prod(jnp.shape(alpha))) > 0
    if has_alpha:
        a = jnp.reshape(alpha, (-1,)).astype(jnp.float32)
        a_len = a.shape[0]
        a_pad = _round_up(a_len, 8 * _LANES) - a_len
        if a_pad:
            # sigmoid(-1e30) == 0 exactly in f32 -> padding contributes nothing.
            a = jnp.pad(a, (0, a_pad), constant_values=-1e30)
        a = jnp.reshape(a, (-1, _LANES))
        inputs.append(a)
        # Full-array resident block, only touched on shard 0's last step.
        in_specs.append(pl.BlockSpec(a.shape, lambda s, k: (0, 0)))

    kernel = functools.partial(
        _alpha_reg_mse_kernel,
        rows_in=rows_in,
        n_elems=total,
        alpha_weight=float(alpha_weight),
        has_alpha=has_alpha,
        steps=steps,
        tile=tile,
        chunk=chunk,
    )

    partials = pl.pallas_call(
        kernel,
        out_shape=jax.ShapeDtypeStruct((n_shards, _LANES), jnp.float32),
        grid_spec=pltpu.PrefetchScalarGridSpec(
            num_scalar_prefetch=0,
            grid=(n_shards, steps),
            in_specs=in_specs,
            out_specs=pl.BlockSpec((1, _LANES), lambda s, k: (s, 0)),
            scratch_shapes=[pltpu.VMEM((8, _LANES), jnp.float32)],
        ),
        compiler_params=pltpu.CompilerParams(
            dimension_semantics=("parallel", "arbitrary"),
            vmem_limit_bytes=32 * 1024 * 1024,
        ),
    )(*inputs)

    # Tiny final combine (n_shards*128 f32): per-lane partial MSEs plus the
    # alpha-regularization term already folded in on shard 0 / lane 0.
    return jnp.sum(partials)


def _reference(y_pred, y_true, alpha, alpha_weight):
    yp = y_pred.astype(jnp.float32)
    yt = y_true.astype(jnp.float32)
    out = jnp.mean((yp - yt) ** 2)
    if alpha is not None:
        out = out + alpha_weight * jnp.sum(
            jax.nn.sigmoid(alpha.reshape(-1).astype(jnp.float32)))
    return out


if __name__ == "__main__":
    key = jax.random.PRNGKey(0)
    k1, k2, k3, k4, k5, k6 = jax.random.split(key, 6)
    alpha_weight = 0.1

    # 1) f32 NCHW pair + small alpha (single full-extent block).
    y_pred = jax.random.normal(k1, (2, 4, 16, 16), dtype=jnp.float32)
    y_true = jax.random.normal(k2, (2, 4, 16, 16), dtype=jnp.float32)
    alpha = jax.random.normal(k3, (2, 4), dtype=jnp.float32)
    out = jax.block_until_ready(
        alpha_regularized_mse_loss(y_pred, y_true, alpha, alpha_weight))
    ref = jax.block_until_ready(_reference(y_pred, y_true, alpha, alpha_weight))
    assert np.allclose(np.asarray(out), np.asarray(ref), rtol=1e-5, atol=1e-5), (
        f"mismatch (f32): kernel={out} ref={ref}")

    # 2) alpha=None path (reg == 0).
    out_none = jax.block_until_ready(
        alpha_regularized_mse_loss(y_pred, y_true, None, alpha_weight))
    ref_none = jax.block_until_ready(_reference(y_pred, y_true, None, alpha_weight))
    assert np.allclose(np.asarray(out_none), np.asarray(ref_none),
                       rtol=1e-5, atol=1e-5), "mismatch (alpha=None)"

    # 3) bf16 inputs (cast-on-load), explicit 2-shard x 2-step grid.
    yp_b = jax.random.normal(k4, (2, 8, 32, 32), dtype=jnp.bfloat16)
    yt_b = jax.random.normal(k5, (2, 8, 32, 32), dtype=jnp.bfloat16)
    a_b = jax.random.normal(k6, (4, 4), dtype=jnp.float32)
    out_b = jax.block_until_ready(
        alpha_regularized_mse_loss(yp_b, yt_b, a_b, alpha_weight,
                                   tile_rows=32, n_shards=2))
    ref_b = jax.block_until_ready(_reference(yp_b, yt_b, a_b, alpha_weight))
    assert np.allclose(np.asarray(out_b), np.asarray(ref_b),
                       rtol=1e-5, atol=1e-5), f"mismatch (bf16): {out_b} vs {ref_b}"

    # 4) Ragged numel (not a multiple of 128) -> lane-pad path + tiny odd tile.
    yp_r = jax.random.normal(k1, (3, 5, 7, 11), dtype=jnp.float32)
    yt_r = jax.random.normal(k2, (3, 5, 7, 11), dtype=jnp.float32)
    a_r = jax.random.normal(k3, (5, 3), dtype=jnp.float32)
    out_r = jax.block_until_ready(
        alpha_regularized_mse_loss(yp_r, yt_r, a_r, alpha_weight))
    ref_r = jax.block_until_ready(_reference(yp_r, yt_r, a_r, alpha_weight))
    assert np.allclose(np.asarray(out_r), np.asarray(ref_r),
                       rtol=1e-5, atol=1e-5), f"mismatch (ragged): {out_r} vs {ref_r}"

    # 5) Rows not a multiple of the tile -> in-kernel row masking + clamped
    #    trailing block indices (no wrapper-side padding of the big inputs).
    yp_c = jax.random.normal(k4, (520, 128), dtype=jnp.float32)
    yt_c = jax.random.normal(k5, (520, 128), dtype=jnp.float32)
    a_c = jax.random.normal(k6, (3,), dtype=jnp.float32)
    out_c = jax.block_until_ready(
        alpha_regularized_mse_loss(yp_c, yt_c, a_c, alpha_weight,
                                   tile_rows=64, n_shards=2))
    ref_c = jax.block_until_ready(_reference(yp_c, yt_c, a_c, alpha_weight))
    assert np.allclose(np.asarray(out_c), np.asarray(ref_c),
                       rtol=1e-5, atol=1e-5), f"mismatch (masked): {out_c} vs {ref_c}"

    print("KERNEL_OK")
</pallas_src>

<mosaic_0001>
module attributes {stable_mosaic.version = 11 : i64} {
  func.func @_alpha_reg_mse_kernel(%arg0: i32, %arg1: i32, %arg2: memref<16x128xf32, #tpu.memory_space<vmem>>, %arg3: memref<16x128xf32, #tpu.memory_space<vmem>>, %arg4: memref<8x128xf32, #tpu.memory_space<vmem>>, %arg5: memref<1x128xf32, #tpu.memory_space<vmem>>, %arg6: memref<8x128xf32, #tpu.memory_space<vmem>>) attributes {dimension_semantics = [#tpu.dimension_semantics<parallel>, #tpu.dimension_semantics<arbitrary>], iteration_bounds = array<i64: 1, 1>, scalar_prefetch = 0 : i64, scratch_operands = 1 : i64, tpu.core_type = #tpu.core_type<tc>, window_params = [{transform_indices = @transform_0, window_bounds = array<i64: 16, 128>}, {transform_indices = @transform_1, window_bounds = array<i64: 16, 128>}, {pipeline_mode = #tpu.pipeline_mode<synchronous>, transform_indices = @transform_2, window_bounds = array<i64: 8, 128>}, {transform_indices = @transform_3, window_bounds = array<i64: 1, 128>}]} {
    %c0_i32 = arith.constant 0 : i32
    %0 = arith.cmpi eq, %arg1, %c0_i32 : i32
    %1 = arith.extui %0 : i1 to i32
    %c0_i32_0 = arith.constant 0 : i32
    %2 = arith.cmpi ne, %1, %c0_i32_0 : i32
    scf.if %2 {
      %cst_13 = arith.constant 0.000000e+00 : f32
      %26 = vector.broadcast %cst_13 : f32 to vector<8x128xf32>
      %c0_14 = arith.constant 0 : index
      %c0_15 = arith.constant 0 : index
      %27 = vector.load %arg6[%c0_14, %c0_15] : memref<8x128xf32, #tpu.memory_space<vmem>>, vector<8x128xf32>
      tpu.vector_store %arg6[%c0_14, %c0_15], %26 {strides = array<i32>} : memref<8x128xf32, #tpu.memory_space<vmem>>, vector<8x128xf32>,
    } else {
    }
    %c1_i32 = arith.constant 1 : i32
    %3 = arith.muli %arg0, %c1_i32 : i32
    %4 = arith.addi %3, %arg1 : i32
    %c16_i32 = arith.constant 16 : i32
    %5 = arith.muli %4, %c16_i32 : i32
    %6 = tpu.iota {dimensions = array<i32: 0>} : vector<16x128xi32>
    %c0 = arith.constant 0 : index
    %c0_1 = arith.constant 0 : index
    %7 = vector.load %arg2[%c0, %c0_1] : memref<16x128xf32, #tpu.memory_space<vmem>>, vector<16x128xf32>
    %c0_2 = arith.constant 0 : index
    %c0_3 = arith.constant 0 : index
    %8 = vector.load %arg3[%c0_2, %c0_3] : memref<16x128xf32, #tpu.memory_space<vmem>>, vector<16x128xf32>
    %9 = arith.subf %7, %8 : vector<16x128xf32>
    %c0_i32_4 = arith.constant 0 : i32
    %10 = arith.addi %5, %c0_i32_4 : i32
    %11 = vector.broadcast %10 : i32 to vector<16x128xi32>
    %12 = arith.addi %6, %11 : vector<16x128xi32>
    %c16_i32_5 = arith.constant 16 : i32
    %13 = vector.broadcast %c16_i32_5 : i32 to vector<16x128xi32>
    %14 = arith.cmpi slt, %12, %13 : vector<16x128xi32>
    %cst = arith.constant 0.000000e+00 : f32
    %15 = vector.broadcast %cst : f32 to vector<16x128xf32>
    %16 = arith.select %14, %9, %15 : vector<16x128xi1>, vector<16x128xf32>
    %17 = arith.mulf %16, %16 : vector<16x128xf32>
    %c0_6 = arith.constant 0 : index
    %c0_7 = arith.constant 0 : index
    %18 = vector.load %arg6[%c0_6, %c0_7] : memref<8x128xf32, #tpu.memory_space<vmem>>, vector<8x128xf32>
    %19 = vector.shape_cast %17 : vector<16x128xf32> to vector<2x8x128xf32>
    %cst_8 = arith.constant dense<0.000000e+00> : vector<8x128xf32>
    %20 = vector.multi_reduction <add>, %19, %cst_8 [0] : vector<2x8x128xf32> to vector<8x128xf32>
    %21 = arith.addf %18, %20 : vector<8x128xf32>
    %c0_9 = arith.constant 0 : index
    %c0_10 = arith.constant 0 : index
    %22 = vector.load %arg6[%c0_9, %c0_10] : memref<8x128xf32, #tpu.memory_space<vmem>>, vector<8x128xf32>
    tpu.vector_store %arg6[%c0_9, %c0_10], %21 {strides = array<i32>} : memref<8x128xf32, #tpu.memory_space<vmem>>, vector<8x128xf32>,
    %c0_i32_11 = arith.constant 0 : i32
    %23 = arith.cmpi eq, %arg1, %c0_i32_11 : i32
    %24 = arith.extui %23 : i1 to i32
    %c0_i32_12 = arith.constant 0 : i32
    %25 = arith.cmpi ne, %24, %c0_i32_12 : i32
    scf.if %25 {
      %c0_13 = arith.constant 0 : index
      %c0_14 = arith.constant 0 : index
      %26 = vector.load %arg6[%c0_13, %c0_14] : memref<8x128xf32, #tpu.memory_space<vmem>>, vector<8x128xf32>
      %cst_15 = arith.constant dense<0.000000e+00> : vector<128xf32>
      %27 = vector.multi_reduction <add>, %26, %cst_15 [0] : vector<8x128xf32> to vector<128xf32>
      %28 = vector.shape_cast %27 : vector<128xf32> to vector<1x128xf32>
      %cst_16 = arith.constant 2.048000e+03 : f32
      %29 = vector.broadcast %cst_16 : f32 to vector<1x128xf32>
      %30 = arith.divf %28, %29 : vector<1x128xf32>
      %c0_17 = arith.constant 0 : index
      %c0_18 = arith.constant 0 : index
      %31 = vector.load %arg5[%c0_17, %c0_18] : memref<1x128xf32, #tpu.memory_space<vmem>>, vector<1x128xf32>
      tpu.vector_store %arg5[%c0_17, %c0_18], %30 {strides = array<i32>} : memref<1x128xf32, #tpu.memory_space<vmem>>, vector<1x128xf32>,
      %c0_i32_19 = arith.constant 0 : i32
      %32 = arith.cmpi eq, %arg0, %c0_i32_19 : i32
      %33 = arith.extui %32 : i1 to i32
      %c0_i32_20 = arith.constant 0 : i32
      %34 = arith.cmpi ne, %33, %c0_i32_20 : i32
      scf.if %34 {
        %c0_21 = arith.constant 0 : index
        %c0_22 = arith.constant 0 : index
        %35 = vector.load %arg4[%c0_21, %c0_22] : memref<8x128xf32, #tpu.memory_space<vmem>>, vector<8x128xf32>
        %36 = arith.negf %35 : vector<8x128xf32>
        %37 = math.exp %36 : vector<8x128xf32>
        %cst_23 = arith.constant 1.000000e+00 : f32
        %38 = vector.broadcast %cst_23 : f32 to vector<8x128xf32>
        %39 = arith.addf %38, %37 : vector<8x128xf32>
        %40 = arith.divf %38, %39 : vector<8x128xf32>
        %41 = vector.shape_cast %40 : vector<8x128xf32> to vector<1x8x128xf32>
        %cst_24 = arith.constant dense<0.000000e+00> : vector<1xf32>
        %42 = vector.multi_reduction <add>, %41, %cst_24 [1, 2] : vector<1x8x128xf32> to vector<1xf32>
        %43 = vector.shape_cast %42 : vector<1xf32> to vector<1x1x1xf32>
        %44 = vector.extract %43[0, 0, 0] : f32 from vector<1x1x1xf32>
        %45 = tpu.iota {dimensions = array<i32: 1>} : vector<1x128xi32>
        %c0_25 = arith.constant 0 : index
        %c0_26 = arith.constant 0 : index
        %46 = vector.load %arg5[%c0_25, %c0_26] : memref<1x128xf32, #tpu.memory_space<vmem>>, vector<1x128xf32>
        %c0_i32_27 = arith.constant 0 : i32
        %47 = vector.broadcast %c0_i32_27 : i32 to vector<1x128xi32>
        %48 = arith.cmpi eq, %45, %47 : vector<1x128xi32>
        %cst_28 = arith.constant 1.000000e-01 : f32
        %49 = arith.mulf %cst_28, %44 : f32
        %cst_29 = arith.constant 0.000000e+00 : f32
        %50 = vector.broadcast %49 : f32 to vector<1x128xf32>
        %51 = vector.broadcast %cst_29 : f32 to vector<1x128xf32>
        %52 = arith.select %48, %50, %51 : vector<1x128xi1>, vector<1x128xf32>
        %53 = arith.addf %46, %52 : vector<1x128xf32>
        %c0_30 = arith.constant 0 : index
        %c0_31 = arith.constant 0 : index
        %54 = vector.load %arg5[%c0_30, %c0_31] : memref<1x128xf32, #tpu.memory_space<vmem>>, vector<1x128xf32>
        tpu.vector_store %arg5[%c0_30, %c0_31], %53 {strides = array<i32>} : memref<1x128xf32, #tpu.memory_space<vmem>>, vector<1x128xf32>,
      } else {
      }
    } else {
    }
    return
  }
  func.func @transform_0(%arg0: i32, %arg1: i32) -> (i32, i32) {
    %c1_i32 = arith.constant 1 : i32
    %0 = arith.muli %arg0, %c1_i32 : i32
    %1 = arith.addi %0, %arg1 : i32
    %c0_i32 = arith.constant 0 : i32
    %2 = arith.minsi %1, %c0_i32 : i32
    %c0_i32_0 = arith.constant 0 : i32
    %c0_i32_1 = arith.constant 0 : i32
    return %2, %c0_i32_0 : i32, i32
  }
  func.func @transform_1(%arg0: i32, %arg1: i32) -> (i32, i32) {
    %c1_i32 = arith.constant 1 : i32
    %0 = arith.muli %arg0, %c1_i32 : i32
    %1 = arith.addi %0, %arg1 : i32
    %c0_i32 = arith.constant 0 : i32
    %2 = arith.minsi %1, %c0_i32 : i32
    %c0_i32_0 = arith.constant 0 : i32
    %c0_i32_1 = arith.constant 0 : i32
    return %2, %c0_i32_0 : i32, i32
  }
  func.func @transform_2(%arg0: i32, %arg1: i32) -> (i32, i32) {
    %c0_i32 = arith.constant 0 : i32
    %c0_i32_0 = arith.constant 0 : i32
    %c0_i32_1 = arith.constant 0 : i32
    return %c0_i32, %c0_i32_0 : i32, i32
  }
  func.func @transform_3(%arg0: i32, %arg1: i32) -> (i32, i32) {
    %c0_i32 = arith.constant 0 : i32
    %c0_i32_0 = arith.constant 0 : i32
    return %arg0, %c0_i32 : i32, i32
  }
}

</mosaic_0001>

<llo_original>
// kernel: tpu_custom_call.1
$region0: #{tpu_custom_call.1}
  #allocation0 [shape = 'u32[]', space=smem, size = 0x4, offset = 0x4, fixed_abs, tag = 'smem constant byte address 0x4 - core index']
  #allocation1 [shape = 'u32[72,128]{1,0:T(1,128)}', space=vmem, size = 0x9000, scoped, tag = 'internal scratch']
  #allocation2 [shape = 'f32[8,128]{1,0:T(8,128)}', space=vmem, size = 0x1000, scoped, tag = 'scratch operand']
  %s0 = inlined_call_operand.hbm [shape: f32[16,128], index: 0, kind: input, shape index: {}]
  %s1 = inlined_call_operand.hbm [shape: f32[16,128], index: 1, kind: input, shape index: {}]
  %s2 = inlined_call_operand.hbm [shape: f32[8,128], index: 2, kind: input, shape index: {}]
  %s3 = inlined_call_operand.hbm [shape: f32[1,128], index: 3, kind: output, shape index: {}]
  %s4 = sld [smem:[#allocation0]]
  $region46: #{tpu_custom_call.1} parent=0
    _
  %s6 = ssub.s32 1, %s4
  %s7 = scalar_select 0, %s6, %s4
  $region1: #{tpu_custom_call.1} parent=0
    #allocation3 [shape = 'u8[8192]{0}', space=vmem, size = 0x2000, scoped, tag = 'input window, operand 0, single buffered']
    #allocation4 [shape = 's32[1]{0}', space=sflag, size = 0x4, scoped, tag = 'scoped memory for tpu_custom_call.1']
    #allocation5 [shape = 's32[1]{0}', space=sflag, size = 0x4, scoped, tag = 'scoped memory for tpu_custom_call.1']
    #allocation6 [shape = 'u8[8192]{0}', space=vmem, size = 0x2000, scoped, tag = 'input window, operand 1, single buffered']
    #allocation7 [shape = 's32[1]{0}', space=sflag, size = 0x4, scoped, tag = 'scoped memory for tpu_custom_call.1']
    #allocation8 [shape = 'u8[4096]{0}', space=vmem, size = 0x1000, scoped, tag = 'input window, operand 2, single buffered']
    #allocation9 [shape = 'u8[512]{0}', space=vmem, size = 0x400, scoped, tag = 'output window, operand 0, single buffered']
    %8 = vsyncpa [#allocation4], 0
    %9 = vsyncpa [#allocation7], 0
    %10 = vsyncpa [#allocation5], 0
    // Predicated region
    $region2: #{tpu_custom_call.1} parent=1 // pred_check
      _
    $region3: #{tpu_custom_call.1} parent=1 // pred_check_branch
      %12 = sbr.rel (0) target = $region5
    $region4: #{tpu_custom_call.1} parent=1 // pred_region
      %s13 = sadd.s32 0, 0
      %p14 = scmp.lt.s32.totalorder %s13, 0
      %s15 = scalar_select %p14, %s13, 0
      %s16 = smul.u32 2, %s15
      %18 = vsyncadd [#allocation4], 0
      %s19 = smul.addr %s16, 8
      %s20 = scalar_lea.hbm %s0, %s19
      %s21 = sshll.u32 %s20, 4
      %s22 = int_to_ptr.hbm [resolvable:$true] %s21
      %s23 = sshll.u32 [#allocation3], 4
      %s24 = int_to_ptr.vmem [resolvable:$true] %s23
      %29 = dma.hbm_to_vmem [thread:$0]  %s22, 256, %s24, [#allocation4], 128, 128, 8
    $region5: #{tpu_custom_call.1} parent=1 // pred_fallthru
      _
    // Predicated region
    $region6: #{tpu_custom_call.1} parent=1 // pred_check
      _
    $region7: #{tpu_custom_call.1} parent=1 // pred_check_branch
      %31 = sbr.rel (0) target = $region9
    $region8: #{tpu_custom_call.1} parent=1 // pred_region
      %s32 = sadd.s32 0, 0
      %p33 = scmp.lt.s32.totalorder %s32, 0
      %s34 = scalar_select %p33, %s32, 0
      %s35 = smul.u32 2, %s34
      %37 = vsyncadd [#allocation7], 0
      %s38 = smul.addr %s35, 8
      %s39 = scalar_lea.hbm %s1, %s38
      %s40 = sshll.u32 %s39, 4
      %s41 = int_to_ptr.hbm [resolvable:$true] %s40
      %s42 = sshll.u32 [#allocation6], 4
      %s43 = int_to_ptr.vmem [resolvable:$true] %s42
      %48 = dma.hbm_to_vmem [thread:$0]  %s41, 256, %s43, [#allocation7], 128, 128, 8
    $region9: #{tpu_custom_call.1} parent=1 // pred_fallthru
      _
    // Predicated region
    $region10: #{tpu_custom_call.1} parent=1 // pred_check
      _
    $region11: #{tpu_custom_call.1} parent=1 // pred_check_branch
      %50 = sbr.rel (0) target = $region13
    $region12: #{tpu_custom_call.1} parent=1 // pred_region
      %52 = vsyncadd [#allocation7], 0
      %s54 = sshll.u32 %s2, 4
      %s55 = int_to_ptr.hbm [resolvable:$true] %s54
      %s56 = sshll.u32 [#allocation8], 4
      %s57 = int_to_ptr.vmem [resolvable:$true] %s56
      %59 = dma.hbm_to_vmem [thread:$0]  %s55, 128, %s57, [#allocation7]
    $region13: #{tpu_custom_call.1} parent=1 // pred_fallthru
      _
    // Predicated region
    $region14: #{tpu_custom_call.1} parent=1 // pred_check
      _
    $region15: #{tpu_custom_call.1} parent=1 // pred_check_branch
      %61 = sbr.rel (0) target = $region17
    $region16: #{tpu_custom_call.1} parent=1 // pred_region
      %63 = dma.done [#allocation4], 256
    $region17: #{tpu_custom_call.1} parent=1 // pred_fallthru
      _
    // Predicated region
    $region18: #{tpu_custom_call.1} parent=1 // pred_check
      _
    $region19: #{tpu_custom_call.1} parent=1 // pred_check_branch
      %65 = sbr.rel (0) target = $region21
    $region20: #{tpu_custom_call.1} parent=1 // pred_region
      %67 = dma.done [#allocation7], 256
    $region21: #{tpu_custom_call.1} parent=1 // pred_fallthru
      _
    // Predicated region
    $region22: #{tpu_custom_call.1} parent=1 // pred_check
      _
    $region23: #{tpu_custom_call.1} parent=1 // pred_check_branch
      %69 = sbr.rel (0) target = $region25
    $region24: #{tpu_custom_call.1} parent=1 // pred_region
      %71 = dma.done [#allocation7], 128
    $region25: #{tpu_custom_call.1} parent=1 // pred_fallthru
      _
    %s72 = sadd.s32 0, 0
    %p73 = scmp.lt.s32.totalorder %s72, 0
    %s74 = scalar_select %p73, %s72, 0
    %s75 = smul.u32 2, %s74
    %s76 = sadd.s32 0, 0
    %p77 = scmp.lt.s32.totalorder %s76, 0
    %s78 = scalar_select %p77, %s76, 0
    %s79 = smul.u32 2, %s78
    %p80 = scmp.eq.s32.totalorder 0, 0
    // Predicated region
    $region26: #{tpu_custom_call.1} parent=1 // pred_check
      %p81 = pneg %p80
    $region27: #{tpu_custom_call.1} parent=1 // pred_check_branch
      %83 = sbr.rel (%p81) target = $region29
    $region28: #{tpu_custom_call.1} parent=1 // pred_region
      %84 = vst [vmem:[#allocation2] sm:$0xff] 0.0
    $region29: #{tpu_custom_call.1} parent=1 // pred_fallthru
      _
    %s85 = sadd.s32 0, 0
    %s86 = smul.u32 %s85, 16
    %v87 = vlaneseq
    %v88 = vshrl.u32 %v87, 7
    %v89 = vadd.s32 %v88, 8
    %v90 = vld [vmem:[#allocation3] sm:$0xff]
    %v91 = vld [vmem:[#allocation3 + $0x8] sm:$0xff]
    %v92 = vld [vmem:[#allocation6] sm:$0xff]
    %v93 = vld [vmem:[#allocation6 + $0x8] sm:$0xff]
    %v94 = vsub.f32 %v90, %v92
    %v95 = vsub.f32 %v91, %v93
    %v96 = vstv %s86
    %v97 = vadd.s32 %v88, %v96
    %v98 = vadd.s32 %v89, %v96
    %vm99 = vcmp.lt.s32.totalorder %v97, 16
    %vm100 = vcmp.lt.s32.totalorder %v98, 16
    %v101 = vsel %vm99, %v94, 0.0
    %v102 = vsel %vm100, %v95, 0.0
    %v103 = vmul.f32 %v101, %v101
    %v104 = vmul.f32 %v102, %v102
    %v105 = vld [vmem:[#allocation2] sm:$0xff]
    %v106 = vadd.f32 %v103, %v104
    %v107 = vadd.f32 %v105, %v106
    %108 = vst [vmem:[#allocation2] sm:$0xff] %v107
    // Predicated region
    $region30: #{tpu_custom_call.1} parent=1 // pred_check
      %p109 = pneg %p80
    $region31: #{tpu_custom_call.1} parent=1 // pred_check_branch
      %111 = sbr.rel (%p109) target = $region33
    $region32: #{tpu_custom_call.1} parent=1 // pred_region
      %v112 = vld [vmem:[#allocation2] sm:$0xff]
      %v113 = vrot.slane %v112, 4
      %v114 = vadd.f32 %v112, %v113
      %v115 = vrot.slane %v114, 2
      %v116 = vadd.f32 %v114, %v115
      %v117 = vrot.slane %v116, 1
      %v118 = vadd.f32 %v116, %v117
      %v119 = vrcp.pop 2048.0
      %v120 = vmul.f32 2048.0, %v119
      %v121 = vsub.f32 1.0, %v120
      %v122 = vmul.f32 %v119, %v121
      %v123 = vadd.f32 %v119, %v122
      %vm124 = vweird.f32 %v119
      %v125 = vsel %vm124, %v119, %v123
      %v126 = vmul.f32 %v118, %v125
      %127 = vst [vmem:[#allocation9] sm:$0x1] %v126
      %p128 = scmp.eq.s32.totalorder 0, 0
      // Predicated region
      $region34: #{tpu_custom_call.1} parent=32 // pred_check
        %p129 = pneg %p128
      $region35: #{tpu_custom_call.1} parent=32 // pred_check_branch
        %131 = sbr.rel (%p129) target = $region37
      $region36: #{tpu_custom_call.1} parent=32 // pred_region
        %v132 = vld [vmem:[#allocation8] sm:$0xff]
        %v133 = vxor.u32 %v132, 2147483648
        %v134 = vmul.f32 %v133, 1.442695
        %v135 = vpow.pop %v134
        %v136 = vadd.f32 %v135, 1.0
        %v137 = vrcp.pop %v136
        %v138 = vmul.f32 %v136, %v137
        %v139 = vsub.f32 1.0, %v138
        %v140 = vmul.f32 %v137, %v139
        %v141 = vadd.f32 %v137, %v140
        %vm142 = vweird.f32 %v136
        %vm143 = vweird.f32 %v137
        %vm144 = vmor %vm142, %vm143
        %v145 = vsel %vm144, %v137, %v141
        %v146 = vand.u32 2147483647, %v136
        %vm147 = vcmp.eq.f32.partialorder %v146, 8.507059e+37
        %v148 = vand.u32 %v136, 2147483648
        %v149 = vor.u32 1.1754944e-38, %v148
        %v150 = vsel %vm147, %v149, %v145
        %v151 = vmul.f32 1.0, %v150
        %152 = vadd.xlane.f32.xlu0 %v151
        %v153 = vpop.xlane.xlu0 %152
        %v154 = vrot.slane %v153, 4
        %v155 = vadd.f32 %v153, %v154
        %v156 = vrot.slane %v155, 2
        %v157 = vadd.f32 %v155, %v156
        %v158 = vrot.slane %v157, 1
        %v159 = vadd.f32 %v157, %v158
        %s160 = vtos %v159
        %v161 = vlaneseq
        %v162 = vand.u32 %v161, 127
        %v163 = vld [vmem:[#allocation9] sm:$0x1]
        %vm164 = vcmp.eq.s32.totalorder %v162, 0
        %s165 = smul.f32 %s160, 0.1
        %v166 = vstv %s165
        %v167 = vsel %vm164, %v166, 0.0
        %v168 = vadd.f32 %v163, %v167
        %169 = vst [vmem:[#allocation9] sm:$0x1] %v168
      $region37: #{tpu_custom_call.1} parent=32 // pred_fallthru
        _
    $region33: #{tpu_custom_call.1} parent=1 // pred_fallthru
      _
    // Predicated region
    $region38: #{tpu_custom_call.1} parent=1 // pred_check
      _
    $region39: #{tpu_custom_call.1} parent=1 // pred_check_branch
      %171 = sbr.rel (0) target = $region41
    $region40: #{tpu_custom_call.1} parent=1 // pred_region
      %173 = vsyncadd [#allocation5], 0
      %s175 = sshll.u32 [#allocation9], 4
      %s176 = int_to_ptr.vmem [resolvable:$true] %s175
      %s177 = sshll.u32 %s3, 4
      %s178 = int_to_ptr.hbm [resolvable:$true] %s177
      %180 = dma.vmem_to_hbm [thread:$0]  %s176, 16, %s178, [#allocation5]
    $region41: #{tpu_custom_call.1} parent=1 // pred_fallthru
      _
    // Predicated region
    $region42: #{tpu_custom_call.1} parent=1 // pred_check
      _
    $region43: #{tpu_custom_call.1} parent=1 // pred_check_branch
      %182 = sbr.rel (0) target = $region45
    $region44: #{tpu_custom_call.1} parent=1 // pred_region
      %184 = dma.done [#allocation5], 16
    $region45: #{tpu_custom_call.1} parent=1 // pred_fallthru
      _
    %185 = vsyncpa [#allocation4], 1
    %186 = vsyncpa [#allocation7], 1
    %187 = vsyncpa [#allocation5], 1

</llo_original>
